<compile_context>
chip_gen: v7x
topology: tpu7x:2x2x1
jax: 0.10.0
libtpu: 0.0.40
codegen_flags: <defaults>
</compile_context>

<pallas_src>
import jax
import jax.numpy as jnp
from jax import lax
from jax.experimental import pallas as pl
from jax.experimental.pallas import tpu as pltpu


# ---------------------------------------------------------------------------
# Kernels
# ---------------------------------------------------------------------------
def _ellmade_kernel_direct(x_ref, w_ref, o_ref):
    """f32 output: the output block itself is the accumulator.

    x_ref: (tm, tk) activation tile (cast to w's compute dtype before the dot)
    w_ref: (tk, tn) pre-transposed weight tile (native MXU RHS layout)
    o_ref: (tm, tn) f32 output tile, resident in VMEM across the k grid axis.
    """
    k = pl.program_id(2)

    @pl.when(k == 0)
    def _():
        o_ref[...] = jnp.zeros_like(o_ref)

    o_ref[...] += lax.dot_general(
        x_ref[...].astype(w_ref.dtype),
        w_ref[...],
        dimension_numbers=(((1,), (0,)), ((), ())),
        preferred_element_type=jnp.float32,
    )

    @pl.when(k == pl.num_programs(2) - 1)
    def _():
        # sigmoid(2*y) == 0.5 * (tanh(y) + 1): single EUP tanh + one VALU fma.
        o_ref[...] = 0.5 * (jnp.tanh(o_ref[...]) + 1.0)


def _ellmade_kernel_scratch(x_ref, w_ref, o_ref, acc_ref):
    """Narrow output dtypes: keep a separate f32 VMEM accumulator."""
    k = pl.program_id(2)

    @pl.when(k == 0)
    def _():
        acc_ref[...] = jnp.zeros_like(acc_ref)

    acc_ref[...] += lax.dot_general(
        x_ref[...].astype(w_ref.dtype),
        w_ref[...],
        dimension_numbers=(((1,), (0,)), ((), ())),
        preferred_element_type=jnp.float32,
    )

    @pl.when(k == pl.num_programs(2) - 1)
    def _():
        o_ref[...] = (0.5 * (jnp.tanh(acc_ref[...]) + 1.0)).astype(o_ref.dtype)


# ---------------------------------------------------------------------------
# Tiling helpers
# ---------------------------------------------------------------------------
def _pick_tile(dim, candidates, align, cap):
    """Largest candidate that evenly divides `dim`.

    Fallbacks (hardened vs. previous version):
      * dim <= cap            -> full-extent block (always layout-legal).
      * dim >  cap            -> largest `align`-multiple divisor <= cap, so big
                                 awkward dims never produce multi-MiB blocks that
                                 blow the scoped-VMEM budget or kill pipelining.
      * no aligned divisor    -> full extent (only legal block); the wrapper
                                 raises vmem_limit_bytes from the footprint.
    """
    for t in candidates:
        if dim >= t and dim % t == 0:
            return t
    if dim <= cap:
        return dim
    t = (cap // align) * align
    while t >= align:
        if dim % t == 0:
            return t
        t -= align
    # TODO(synk): truly pathological (prime-ish) huge dims should be padded
    # wrapper-side instead of using a full-extent block (matters most on v7x).
    return dim


def prepare_weight(w, compute_dtype=jnp.bfloat16):
    """One-time inference-side prep of a PyTorch Linear weight (out, in).

    Returns (w_prepared, out_features) where w_prepared is (K, N_pad):
      * transposed to (K, N): native MXU RHS layout, no per-tile transpose,
      * cast to `compute_dtype` (bf16 -> full-rate MXU inputs),
      * N zero-padded to a multiple of 128 for lane-dense output stores
        (padded columns produce sigmoid(0)=0.5 and are sliced off).
    """
    n, k = w.shape
    w_t = jnp.asarray(w).T.astype(compute_dtype)  # (K, N)
    n_pad = ((n + 127) // 128) * 128
    if n_pad != n:
        w_t = jnp.pad(w_t, ((0, 0), (0, n_pad - n)))
    return w_t, n


# ---------------------------------------------------------------------------
# Forward
# ---------------------------------------------------------------------------
def ellmade_forward_prepared(x, w_prepared, out_features=None):
    """x: (B, K); w_prepared: (K, N_pad) from prepare_weight(). Returns (B, out_features)."""
    B, K = x.shape
    K2, n_pad = w_prepared.shape
    assert K == K2, "weight in-features must match x features"
    if out_features is None:
        out_features = n_pad
    out_dtype = x.dtype

    tm = _pick_tile(B, (512, 256, 128), align=8, cap=512)
    tn = _pick_tile(n_pad, (1024, 512, 256, 128), align=128, cap=1024)
    tk = _pick_tile(K, (512, 256, 128), align=128, cap=1024)
    grid = (B // tm, n_pad // tn, K // tk)

    # f32 outputs accumulate directly into the resident output block; narrow
    # output dtypes keep an f32 VMEM scratch accumulator.
    use_scratch = out_dtype != jnp.float32
    kernel = _ellmade_kernel_scratch if use_scratch else _ellmade_kernel_direct
    scratch_shapes = [pltpu.VMEM((tm, tn), jnp.float32)] if use_scratch else []

    # Double-buffered footprint -> only raise the scoped-VMEM limit when needed.
    x_tile_b = tm * tk * x.dtype.itemsize
    w_tile_b = tk * tn * w_prepared.dtype.itemsize
    o_tile_b = tm * tn * jnp.zeros((), out_dtype).dtype.itemsize
    acc_b = tm * tn * 4 if use_scratch else 0
    need = 2 * (x_tile_b + w_tile_b) + 2 * o_tile_b + acc_b
    compiler_kwargs = dict(dimension_semantics=("parallel", "parallel", "arbitrary"))
    if need > (12 << 20):
        # 56 MiB keeps headroom under v7x's 64 MiB physical VMEM per TC.
        compiler_kwargs["vmem_limit_bytes"] = min(need + (8 << 20), 56 << 20)

    cost = pl.CostEstimate(
        flops=2 * B * n_pad * K,
        transcendentals=B * n_pad,
        bytes_accessed=int(
            B * K * x.dtype.itemsize
            + K * n_pad * w_prepared.dtype.itemsize
            + B * n_pad * jnp.zeros((), out_dtype).dtype.itemsize
        ),
    )

    out = pl.pallas_call(
        kernel,
        out_shape=jax.ShapeDtypeStruct((B, n_pad), out_dtype),
        grid_spec=pltpu.PrefetchScalarGridSpec(
            num_scalar_prefetch=0,
            grid=grid,
            in_specs=[
                pl.BlockSpec((tm, tk), lambda i, j, k: (i, k)),  # x tile
                pl.BlockSpec((tk, tn), lambda i, j, k: (k, j)),  # pre-transposed w tile
            ],
            out_specs=pl.BlockSpec((tm, tn), lambda i, j, k: (i, j)),
            scratch_shapes=scratch_shapes,
        ),
        compiler_params=pltpu.CompilerParams(**compiler_kwargs),
        cost_estimate=cost,
    )(x, w_prepared)

    if out_features != n_pad:
        out = out[:, :out_features]
    return out


def ellmade_forward(x, w, compute_dtype=jnp.bfloat16):
    """Convenience wrapper taking the PyTorch (out_features, in_features) weight.

    For repeated inference calls, run prepare_weight() once and call
    ellmade_forward_prepared() directly so the transpose/cast/pad is amortized.
    """
    w_prep, n_out = prepare_weight(w, compute_dtype=compute_dtype)
    return ellmade_forward_prepared(x, w_prep, n_out)


# ---------------------------------------------------------------------------
# Demo / self-check
# ---------------------------------------------------------------------------
if __name__ == "__main__":
    key = jax.random.PRNGKey(0)
    kx, kw = jax.random.split(key)

    B, D = 8, 32  # batch=8, input_size=32 (matches the PyTorch module)

    x = jax.random.normal(kx, (B, D), dtype=jnp.float32)
    # Deterministic init mimicking nn.Linear default (uniform in +/- 1/sqrt(D))
    bound = 1.0 / jnp.sqrt(jnp.float32(D))
    w = jax.random.uniform(kw, (D, D), dtype=jnp.float32, minval=-bound, maxval=bound)

    ref = jax.nn.sigmoid(2.0 * (x @ w.T))

    # Exact path: f32 MXU inputs, matches the PyTorch module bit-tight.
    out_f32 = ellmade_forward(x, w, compute_dtype=jnp.float32)
    jax.block_until_ready(out_f32)
    assert out_f32.shape == (B, D)
    assert jnp.allclose(out_f32, ref, atol=1e-5, rtol=1e-5)

    # Fast path (default): bf16 MXU inputs, f32 accumulation (~3-4x matmul
    # throughput on real sizes); bf16-mantissa input error only.
    out_bf16 = ellmade_forward(x, w)
    jax.block_until_ready(out_bf16)
    assert out_bf16.shape == (B, D)
    assert jnp.allclose(out_bf16, ref, atol=2e-2, rtol=2e-2)

    # TODO(synk): torch.cuda.empty_cache() has no TPU/JAX equivalent (no-op here).
    print("KERNEL_OK")
</pallas_src>

<mosaic_0001>
module attributes {stable_mosaic.version = 11 : i64} {
  func.func @_ellmade_kernel_direct(%arg0: i32, %arg1: i32, %arg2: i32, %arg3: memref<8x32xf32, #tpu.memory_space<vmem>>, %arg4: memref<32x128xf32, #tpu.memory_space<vmem>>, %arg5: memref<8x128xf32, #tpu.memory_space<vmem>>) attributes {dimension_semantics = [#tpu.dimension_semantics<parallel>, #tpu.dimension_semantics<parallel>, #tpu.dimension_semantics<arbitrary>], iteration_bounds = array<i64: 1, 1, 1>, scalar_prefetch = 0 : i64, scratch_operands = 0 : i64, tpu.core_type = #tpu.core_type<tc>, window_params = [{transform_indices = @transform_0, window_bounds = array<i64: 8, 32>}, {transform_indices = @transform_1, window_bounds = array<i64: 32, 128>}, {transform_indices = @transform_2, window_bounds = array<i64: 8, 128>}]} {
    %c0_i32 = arith.constant 0 : i32
    %0 = arith.cmpi eq, %arg2, %c0_i32 : i32
    %1 = arith.extui %0 : i1 to i32
    %c0_i32_0 = arith.constant 0 : i32
    %2 = arith.cmpi ne, %1, %c0_i32_0 : i32
    scf.if %2 {
      %cst_10 = arith.constant 0.000000e+00 : f32
      %12 = vector.broadcast %cst_10 : f32 to vector<8x128xf32>
      %c0_11 = arith.constant 0 : index
      %c0_12 = arith.constant 0 : index
      %13 = vector.load %arg5[%c0_11, %c0_12] : memref<8x128xf32, #tpu.memory_space<vmem>>, vector<8x128xf32>
      tpu.vector_store %arg5[%c0_11, %c0_12], %12 {strides = array<i32>} : memref<8x128xf32, #tpu.memory_space<vmem>>, vector<8x128xf32>,
    } else {
    }
    %c0 = arith.constant 0 : index
    %c0_1 = arith.constant 0 : index
    %3 = vector.load %arg5[%c0, %c0_1] : memref<8x128xf32, #tpu.memory_space<vmem>>, vector<8x128xf32>
    %c0_2 = arith.constant 0 : index
    %c0_3 = arith.constant 0 : index
    %4 = vector.load %arg3[%c0_2, %c0_3] : memref<8x32xf32, #tpu.memory_space<vmem>>, vector<8x32xf32>
    %c0_4 = arith.constant 0 : index
    %c0_5 = arith.constant 0 : index
    %5 = vector.load %arg4[%c0_4, %c0_5] : memref<32x128xf32, #tpu.memory_space<vmem>>, vector<32x128xf32>
    %cst = arith.constant dense<0.000000e+00> : vector<8x128xf32>
    %6 = tpu.matmul %4, %5, %cst {dimension_numbers = #tpu.dot_dimension_numbers<[1], [0], [0], [1], [0, 0, 1, 1], [], []>} : vector<8x32xf32>, vector<32x128xf32>, vector<8x128xf32> -> vector<8x128xf32>
    %7 = arith.addf %3, %6 : vector<8x128xf32>
    %c0_6 = arith.constant 0 : index
    %c0_7 = arith.constant 0 : index
    %8 = vector.load %arg5[%c0_6, %c0_7] : memref<8x128xf32, #tpu.memory_space<vmem>>, vector<8x128xf32>
    tpu.vector_store %arg5[%c0_6, %c0_7], %7 {strides = array<i32>} : memref<8x128xf32, #tpu.memory_space<vmem>>, vector<8x128xf32>,
    %c0_i32_8 = arith.constant 0 : i32
    %9 = arith.cmpi eq, %arg2, %c0_i32_8 : i32
    %10 = arith.extui %9 : i1 to i32
    %c0_i32_9 = arith.constant 0 : i32
    %11 = arith.cmpi ne, %10, %c0_i32_9 : i32
    scf.if %11 {
      %c0_10 = arith.constant 0 : index
      %c0_11 = arith.constant 0 : index
      %12 = vector.load %arg5[%c0_10, %c0_11] : memref<8x128xf32, #tpu.memory_space<vmem>>, vector<8x128xf32>
      %13 = math.tanh %12 : vector<8x128xf32>
      %cst_12 = arith.constant 1.000000e+00 : f32
      %14 = vector.broadcast %cst_12 : f32 to vector<8x128xf32>
      %15 = arith.addf %13, %14 : vector<8x128xf32>
      %cst_13 = arith.constant 5.000000e-01 : f32
      %16 = vector.broadcast %cst_13 : f32 to vector<8x128xf32>
      %17 = arith.mulf %16, %15 : vector<8x128xf32>
      %c0_14 = arith.constant 0 : index
      %c0_15 = arith.constant 0 : index
      %18 = vector.load %arg5[%c0_14, %c0_15] : memref<8x128xf32, #tpu.memory_space<vmem>>, vector<8x128xf32>
      tpu.vector_store %arg5[%c0_14, %c0_15], %17 {strides = array<i32>} : memref<8x128xf32, #tpu.memory_space<vmem>>, vector<8x128xf32>,
    } else {
    }
    return
  }
  func.func @transform_0(%arg0: i32, %arg1: i32, %arg2: i32) -> (i32, i32) {
    %c0_i32 = arith.constant 0 : i32
    return %arg0, %arg2 : i32, i32
  }
  func.func @transform_1(%arg0: i32, %arg1: i32, %arg2: i32) -> (i32, i32) {
    %c0_i32 = arith.constant 0 : i32
    return %arg2, %arg1 : i32, i32
  }
  func.func @transform_2(%arg0: i32, %arg1: i32, %arg2: i32) -> (i32, i32) {
    %c0_i32 = arith.constant 0 : i32
    return %arg0, %arg1 : i32, i32
  }
}

</mosaic_0001>

<llo_original>
// kernel: tpu_custom_call.1
$region0: #{tpu_custom_call.1}
  #allocation0 [shape = 'u32[]', space=smem, size = 0x4, offset = 0x4, fixed_abs, tag = 'smem constant byte address 0x4 - core index']
  #allocation1 [shape = 'u32[144,128]{1,0:T(1,128)}', space=vmem, size = 0x12000, scoped, tag = 'internal scratch']
  %s0 = inlined_call_operand.hbm [shape: f32[8,32], index: 0, kind: input, shape index: {}]
  %s1 = inlined_call_operand.hbm [shape: f32[32,128], index: 1, kind: input, shape index: {}]
  %s2 = inlined_call_operand.hbm [shape: f32[8,128], index: 2, kind: output, shape index: {}]
  %s3 = sld [smem:[#allocation0]]
  $region34: #{tpu_custom_call.1} parent=0
    _
  %s5 = ssub.s32 1, %s3
  %s6 = scalar_select 0, %s5, %s3
  $region1: #{tpu_custom_call.1} parent=0
    #allocation2 [shape = 'u8[4096]{0}', space=vmem, size = 0x1000, scoped, tag = 'input window, operand 0, single buffered']
    #allocation3 [shape = 's32[1]{0}', space=sflag, size = 0x4, scoped, tag = 'scoped memory for tpu_custom_call.1']
    #allocation4 [shape = 's32[1]{0}', space=sflag, size = 0x4, scoped, tag = 'scoped memory for tpu_custom_call.1']
    #allocation5 [shape = 'u8[16384]{0}', space=vmem, size = 0x4000, scoped, tag = 'input window, operand 1, single buffered']
    #allocation6 [shape = 's32[1]{0}', space=sflag, size = 0x4, scoped, tag = 'scoped memory for tpu_custom_call.1']
    #allocation7 [shape = 'u8[4096]{0}', space=vmem, size = 0x1000, scoped, tag = 'output window, operand 0, single buffered']
    %7 = vsyncpa [#allocation3], 0
    %8 = vsyncpa [#allocation6], 0
    %9 = vsyncpa [#allocation4], 0
    // Predicated region
    $region2: #{tpu_custom_call.1} parent=1 // pred_check
      _
    $region3: #{tpu_custom_call.1} parent=1 // pred_check_branch
      %11 = sbr.rel (0) target = $region5
    $region4: #{tpu_custom_call.1} parent=1 // pred_region
      %s13 = ssub.s32 128, 128
      %14 = vsyncadd [#allocation3], %s13
      %s16 = sshll.u32 [#allocation2], 4
      %s17 = int_to_ptr.vmem [resolvable:$true] %s16
      %19 = dma.hbm_to_vmem [thread:$0]  %s0, 128, %s17, [#allocation3]
    $region5: #{tpu_custom_call.1} parent=1 // pred_fallthru
      _
    // Predicated region
    $region6: #{tpu_custom_call.1} parent=1 // pred_check
      _
    $region7: #{tpu_custom_call.1} parent=1 // pred_check_branch
      %21 = sbr.rel (0) target = $region9
    $region8: #{tpu_custom_call.1} parent=1 // pred_region
      %s23 = ssub.s32 512, 512
      %24 = vsyncadd [#allocation6], %s23
      %s25 = sshll.u32 [#allocation5], 4
      %s26 = int_to_ptr.vmem [resolvable:$true] %s25
      %31 = dma.hbm_to_vmem [thread:$0]  %s1, 512, %s26, [#allocation6], 128, 128, 8
    $region9: #{tpu_custom_call.1} parent=1 // pred_fallthru
      _
    // Predicated region
    $region10: #{tpu_custom_call.1} parent=1 // pred_check
      _
    $region11: #{tpu_custom_call.1} parent=1 // pred_check_branch
      %33 = sbr.rel (0) target = $region13
    $region12: #{tpu_custom_call.1} parent=1 // pred_region
      %34 = dma.done [#allocation3], 128
    $region13: #{tpu_custom_call.1} parent=1 // pred_fallthru
      _
    // Predicated region
    $region14: #{tpu_custom_call.1} parent=1 // pred_check
      _
    $region15: #{tpu_custom_call.1} parent=1 // pred_check_branch
      %36 = sbr.rel (0) target = $region17
    $region16: #{tpu_custom_call.1} parent=1 // pred_region
      %37 = dma.done [#allocation6], 512
    $region17: #{tpu_custom_call.1} parent=1 // pred_fallthru
      _
    %p38 = scmp.eq.s32.totalorder 0, 0
    // Predicated region
    $region18: #{tpu_custom_call.1} parent=1 // pred_check
      %p39 = pneg %p38
    $region19: #{tpu_custom_call.1} parent=1 // pred_check_branch
      %41 = sbr.rel (%p39) target = $region21
    $region20: #{tpu_custom_call.1} parent=1 // pred_region
      %42 = vst [vmem:[#allocation7] sm:$0xff] 0.0
    $region21: #{tpu_custom_call.1} parent=1 // pred_fallthru
      _
    %v43 = vld [vmem:[#allocation7] sm:$0xff]
    %v44 = vld [vmem:[#allocation2] sm:$0xff]
    %v45 = vld [vmem:[#allocation5] sm:$0xff]
    %v46 = vld [vmem:[#allocation5 + $0x8] sm:$0xff]
    %v47 = vld [vmem:[#allocation5 + $0x10] sm:$0xff]
    %v48 = vld [vmem:[#allocation5 + $0x18] sm:$0xff]
    %vm49 = vcmask 261120
    %v51 = vsel %vm49, %v44, 0
    %53 = vmatprep.subr.mxu0 0.0
    %54 = vmatpush1.msra.mxu0 %v45
    %55 = vmatprep.subr.mxu0 0.0
    %56 = vmatpush1.msra.mxu0 %v46
    %57 = vmatprep.subr.mxu0 0.0
    %58 = vmatpush1.msra.mxu0 %v47
    %59 = vmatprep.subr.mxu0 0.0
    %60 = vmatpush1.msra.mxu0 %v48
    %61 = vmatprep.subr.mxu0 0.0
    %62 = vmatpush1.msra.mxu0 0.0
    %63 = vmatprep.subr.mxu0 0.0
    %64 = vmatpush1.msra.mxu0 0.0
    %65 = vmatprep.subr.mxu0 0.0
    %66 = vmatpush1.msra.mxu0 0.0
    %67 = vmatprep.subr.mxu0 0.0
    %68 = vmatpush1.msra.mxu0 0.0
    %69 = vmatprep.subr.mxu0 0.0
    %70 = vmatpush1.msra.mxu0 0.0
    %71 = vmatprep.subr.mxu0 0.0
    %72 = vmatpush1.msra.mxu0 0.0
    %73 = vmatprep.subr.mxu0 0.0
    %74 = vmatpush1.msra.mxu0 0.0
    %75 = vmatprep.subr.mxu0 0.0
    %76 = vmatpush1.msra.mxu0 0.0
    %77 = vmatprep.subr.mxu0 0.0
    %78 = vmatpush1.msra.mxu0 0.0
    %79 = vmatprep.subr.mxu0 0.0
    %80 = vmatpush1.msra.mxu0 0.0
    %81 = vmatprep.subr.mxu0 0.0
    %82 = vmatpush1.msra.mxu0 0.0
    %83 = vmatprep.subr.mxu0 0.0
    %84 = vmatpush1.msra.mxu0 0.0
    %85 = vmatprep.subr.mxu0 0.0
    %86 = vmatpush1.msra.mxu0 0.0
    %87 = vmatprep.subr.mxu0 0.0
    %88 = vmatpush1.msra.mxu0 0.0
    %89 = vmatprep.subr.mxu0 0.0
    %90 = vmatpush1.msra.mxu0 0.0
    %91 = vmatprep.subr.mxu0 0.0
    %92 = vmatpush1.msra.mxu0 0.0
    %93 = vmatprep.subr.mxu0 0.0
    %94 = vmatpush1.msra.mxu0 0.0
    %95 = vmatprep.subr.mxu0 0.0
    %96 = vmatpush1.msra.mxu0 0.0
    %97 = vmatprep.subr.mxu0 0.0
    %98 = vmatpush1.msra.mxu0 0.0
    %99 = vmatprep.subr.mxu0 0.0
    %100 = vmatpush1.msra.mxu0 0.0
    %101 = vmatprep.subr.mxu0 0.0
    %102 = vmatpush1.msra.mxu0 0.0
    %103 = vmatprep.subr.mxu0 0.0
    %104 = vmatpush1.msra.mxu0 0.0
    %105 = vmatprep.subr.mxu0 0.0
    %106 = vmatpush1.msra.mxu0 0.0
    %107 = vmatprep.subr.mxu0 0.0
    %108 = vmatpush1.msra.mxu0 0.0
    %109 = vmatprep.subr.mxu0 0.0
    %110 = vmatpush1.msra.mxu0 0.0
    %111 = vmatprep.subr.mxu0 0.0
    %112 = vmatpush1.msra.mxu0 0.0
    %113 = vmatprep.subr.mxu0 0.0
    %114 = vmatpush1.msra.mxu0 0.0
    %115 = vmatprep.subr.mxu0 0.0
    %116 = vmatpush1.msra.mxu0 0.0
    %117 = vmatprep.mubr.f32.mxu0 0.0
    %118 = vmatmul.mubr.f32.gmra.mrb[0].mxu0 %v51
    %v119 = vpop.f32.mrb[0].mxu0
    %v120 = vadd.f32 0.0, %v119
    %v121 = vpop.f32.mrb[0].mxu0
    %122 = vdwg.mxu0
    %v123 = vadd.f32 %v43, %v120
    %124 = vst [vmem:[#allocation7] sm:$0xff] %v123
    // Predicated region
    $region22: #{tpu_custom_call.1} parent=1 // pred_check
      %p125 = pneg %p38
    $region23: #{tpu_custom_call.1} parent=1 // pred_check_branch
      %127 = sbr.rel (%p125) target = $region25
    $region24: #{tpu_custom_call.1} parent=1 // pred_region
      %v128 = vld [vmem:[#allocation7] sm:$0xff]
      %v129 = vtanh.pop %v128
      %v130 = vadd.f32 %v129, 1.0
      %v131 = vmul.f32 %v130, 0.5
      %132 = vst [vmem:[#allocation7] sm:$0xff] %v131
    $region25: #{tpu_custom_call.1} parent=1 // pred_fallthru
      _
    // Predicated region
    $region26: #{tpu_custom_call.1} parent=1 // pred_check
      _
    $region27: #{tpu_custom_call.1} parent=1 // pred_check_branch
      %134 = sbr.rel (0) target = $region29
    $region28: #{tpu_custom_call.1} parent=1 // pred_region
      %s136 = ssub.s32 128, 128
      %137 = vsyncadd [#allocation4], %s136
      %s139 = sshll.u32 [#allocation7], 4
      %s140 = int_to_ptr.vmem [resolvable:$true] %s139
      %142 = dma.vmem_to_hbm [thread:$0]  %s140, 128, %s2, [#allocation4]
    $region29: #{tpu_custom_call.1} parent=1 // pred_fallthru
      _
    // Predicated region
    $region30: #{tpu_custom_call.1} parent=1 // pred_check
      _
    $region31: #{tpu_custom_call.1} parent=1 // pred_check_branch
      %144 = sbr.rel (0) target = $region33
    $region32: #{tpu_custom_call.1} parent=1 // pred_region
      %145 = dma.done [#allocation4], 128
    $region33: #{tpu_custom_call.1} parent=1 // pred_fallthru
      _
    %146 = vsyncpa [#allocation3], 1
    %147 = vsyncpa [#allocation6], 1
    %148 = vsyncpa [#allocation4], 1

</llo_original>
